<compile_context>
chip_gen: v7x
topology: tpu7x:2x2x1
jax: 0.10.0
libtpu: 0.0.40
codegen_flags: <defaults>
</compile_context>

<pallas_src>
import functools

import jax
import jax.numpy as jnp
from jax.experimental import pallas as pl
from jax.experimental.pallas import tpu as pltpu


def _hadamard_dropout_kernel(seed_ref, img_ref, txt_ref, out_ref, *, p, tile_rows):
    fused = img_ref[...] * txt_ref[...]
    tb, d = fused.shape

    # Counter-based PRNG: splitmix32-style integer hash of the global element
    # index, keyed by the scalar seed.  Pure int32/uint32 VPU ops, so it lowers
    # on TPU (Mosaic) and in interpret mode alike, and each grid tile sees a
    # distinct slice of the stream because the global row index folds in
    # pl.program_id(0).
    row = jax.lax.broadcasted_iota(jnp.int32, (tb, d), 0)
    col = jax.lax.broadcasted_iota(jnp.int32, (tb, d), 1)
    global_row = row + pl.program_id(0) * tile_rows
    idx = global_row.astype(jnp.uint32) * jnp.uint32(d) + col.astype(jnp.uint32)

    x = idx ^ (seed_ref[0].astype(jnp.uint32) * jnp.uint32(0x9E3779B9))
    x = (x ^ (x >> jnp.uint32(16))) * jnp.uint32(0x7FEB352D)
    x = (x ^ (x >> jnp.uint32(15))) * jnp.uint32(0x846CA68B)
    x = x ^ (x >> jnp.uint32(16))

    # Keep with probability (1 - p): compare raw uint32 bits against p * 2^32.
    thr = jnp.uint32(min(int(round(p * 2.0**32)), 2**32 - 1))
    inv_keep = jnp.asarray(1.0 / (1.0 - p), fused.dtype)
    out_ref[...] = jnp.where(x >= thr, fused * inv_keep, jnp.zeros_like(fused))


def hadamard_fusion(image_emb, text_emb, *, p=0.1, training=False, seed=0,
                    tile_rows=None):
    """Pallas implementation of HadamardFusion.forward.

    image_emb, text_emb: (batch, embed_dim) arrays of the same shape/dtype.
    """
    assert image_emb.shape == text_emb.shape
    assert image_emb.dtype == text_emb.dtype
    B, D = image_emb.shape

    if (not training) or p <= 0.0:
        # Eval mode / no dropout: a bare multiply lets XLA fuse the Hadamard
        # product into neighboring ops — a pallas_call here is pure overhead.
        return image_emb * text_emb
    if p >= 1.0:
        return jnp.zeros_like(image_emb)

    # Batch tiling: big enough to amortize per-grid-step overhead, small enough
    # to double-buffer 2 inputs + 1 output comfortably inside every
    # generation's scoped VMEM (v5e 16 MiB default, v7x 64 MiB physical).
    if tile_rows is None:
        tile_rows = B if B <= 512 else 512
    tile_rows = min(int(tile_rows), B)
    grid = (pl.cdiv(B, tile_rows),)

    kernel = functools.partial(
        _hadamard_dropout_kernel, p=float(p), tile_rows=int(tile_rows)
    )
    seed_arr = jnp.asarray([seed], dtype=jnp.int32)

    return pl.pallas_call(
        kernel,
        out_shape=jax.ShapeDtypeStruct((B, D), image_emb.dtype),
        grid_spec=pltpu.PrefetchScalarGridSpec(
            num_scalar_prefetch=1,          # dropout seed lives in SMEM
            grid=grid,
            in_specs=[
                pl.BlockSpec((tile_rows, D), lambda i, seed: (i, 0)),
                pl.BlockSpec((tile_rows, D), lambda i, seed: (i, 0)),
            ],
            # Full D on the last axis keeps output stores lane-dense.
            out_specs=pl.BlockSpec((tile_rows, D), lambda i, seed: (i, 0)),
        ),
        compiler_params=pltpu.CompilerParams(
            dimension_semantics=("parallel",),   # batch tiles are independent
        ),
    )(seed_arr, image_emb, text_emb)


if __name__ == "__main__":
    key = jax.random.PRNGKey(0)
    k_img, k_txt = jax.random.split(key)

    # CLIP ViT-L/14 fused-projection width, small batch; tile_rows=8 gives a
    # 3-step grid so the pipelined/tiled path is actually exercised.
    batch, embed_dim = 24, 768
    image_emb = jax.random.normal(k_img, (batch, embed_dim), dtype=jnp.float32)
    text_emb = jax.random.normal(k_txt, (batch, embed_dim), dtype=jnp.float32)
    fused_ref = image_emb * text_emb

    # Eval mode — dropout is identity (plain multiply, no Pallas launch).
    out_eval = jax.block_until_ready(
        hadamard_fusion(image_emb, text_emb, p=0.1, training=False)
    )
    assert jnp.allclose(out_eval, fused_ref, atol=1e-6), "eval mismatch"

    # Training mode — dropout with inverted scaling, deterministic seed.
    p = 0.1
    out_train = jax.block_until_ready(
        hadamard_fusion(image_emb, text_emb, p=p, training=True, seed=1234,
                        tile_rows=8)
    )
    kept = out_train != 0
    assert jnp.allclose(
        jnp.where(kept, out_train, 0.0),
        jnp.where(kept, fused_ref / (1.0 - p), 0.0),
        atol=1e-5, rtol=1e-5,
    ), "train-mode scaling mismatch"
    drop_frac = float(1.0 - jnp.mean(kept.astype(jnp.float32)))
    assert 0.02 <= drop_frac <= 0.30, f"unexpected drop fraction {drop_frac}"

    print("KERNEL_OK")
</pallas_src>

<mosaic_0001>
module attributes {stable_mosaic.version = 11 : i64} {
  func.func @_hadamard_dropout_kernel(%arg0: i32, %arg1: memref<1xi32, #tpu.memory_space<smem>>, %arg2: memref<8x768xf32, #tpu.memory_space<vmem>>, %arg3: memref<8x768xf32, #tpu.memory_space<vmem>>, %arg4: memref<8x768xf32, #tpu.memory_space<vmem>>) attributes {dimension_semantics = [#tpu.dimension_semantics<parallel>], iteration_bounds = array<i64: 3>, scalar_prefetch = 1 : i64, scratch_operands = 0 : i64, tpu.core_type = #tpu.core_type<tc>, window_params = [{transform_indices = @transform_0, window_bounds = array<i64: 8, 768>}, {transform_indices = @transform_1, window_bounds = array<i64: 8, 768>}, {transform_indices = @transform_2, window_bounds = array<i64: 8, 768>}]} {
    %c0 = arith.constant 0 : index
    %c0_0 = arith.constant 0 : index
    %0 = vector.load %arg2[%c0, %c0_0] : memref<8x768xf32, #tpu.memory_space<vmem>>, vector<8x768xf32>
    %c0_1 = arith.constant 0 : index
    %c0_2 = arith.constant 0 : index
    %1 = vector.load %arg3[%c0_1, %c0_2] : memref<8x768xf32, #tpu.memory_space<vmem>>, vector<8x768xf32>
    %2 = arith.mulf %0, %1 : vector<8x768xf32>
    %3 = tpu.iota {dimensions = array<i32: 0>} : vector<8x768xi32>
    %4 = tpu.iota {dimensions = array<i32: 1>} : vector<8x768xi32>
    %c8_i32 = arith.constant 8 : i32
    %5 = arith.muli %arg0, %c8_i32 : i32
    %6 = vector.broadcast %5 : i32 to vector<8x768xi32>
    %7 = arith.addi %3, %6 : vector<8x768xi32>
    %c768_i32 = arith.constant 768 : i32
    %8 = vector.broadcast %c768_i32 : i32 to vector<8x768xi32>
    %9 = arith.muli %7, %8 : vector<8x768xi32>
    %10 = arith.addi %9, %4 : vector<8x768xi32>
    %c0_3 = arith.constant 0 : index
    %11 = memref.load %arg1[%c0_3] : memref<1xi32, #tpu.memory_space<smem>>
    %c-1640531527_i32 = arith.constant -1640531527 : i32
    %12 = arith.muli %11, %c-1640531527_i32 : i32
    %13 = vector.broadcast %12 : i32 to vector<8x768xi32>
    %14 = arith.xori %10, %13 : vector<8x768xi32>
    %c16_i32 = arith.constant 16 : i32
    %15 = vector.broadcast %c16_i32 : i32 to vector<8x768xi32>
    %16 = arith.shrui %14, %15 : vector<8x768xi32>
    %17 = arith.xori %14, %16 : vector<8x768xi32>
    %c2146121005_i32 = arith.constant 2146121005 : i32
    %18 = vector.broadcast %c2146121005_i32 : i32 to vector<8x768xi32>
    %19 = arith.muli %17, %18 : vector<8x768xi32>
    %c15_i32 = arith.constant 15 : i32
    %20 = vector.broadcast %c15_i32 : i32 to vector<8x768xi32>
    %21 = arith.shrui %19, %20 : vector<8x768xi32>
    %22 = arith.xori %19, %21 : vector<8x768xi32>
    %c-2073254261_i32 = arith.constant -2073254261 : i32
    %23 = vector.broadcast %c-2073254261_i32 : i32 to vector<8x768xi32>
    %24 = arith.muli %22, %23 : vector<8x768xi32>
    %c16_i32_4 = arith.constant 16 : i32
    %25 = vector.broadcast %c16_i32_4 : i32 to vector<8x768xi32>
    %26 = arith.shrui %24, %25 : vector<8x768xi32>
    %27 = arith.xori %24, %26 : vector<8x768xi32>
    %c429496730_i32 = arith.constant 429496730 : i32
    %28 = vector.broadcast %c429496730_i32 : i32 to vector<8x768xi32>
    %29 = arith.cmpi uge, %27, %28 : vector<8x768xi32>
    %cst = arith.constant 1.11111116 : f32
    %30 = vector.broadcast %cst : f32 to vector<8x768xf32>
    %31 = arith.mulf %2, %30 : vector<8x768xf32>
    %cst_5 = arith.constant 0.000000e+00 : f32
    %32 = vector.broadcast %cst_5 : f32 to vector<8x768xf32>
    %33 = arith.select %29, %31, %32 : vector<8x768xi1>, vector<8x768xf32>
    %c0_6 = arith.constant 0 : index
    %c0_7 = arith.constant 0 : index
    %34 = vector.load %arg4[%c0_6, %c0_7] : memref<8x768xf32, #tpu.memory_space<vmem>>, vector<8x768xf32>
    tpu.vector_store %arg4[%c0_6, %c0_7], %33 {strides = array<i32>} : memref<8x768xf32, #tpu.memory_space<vmem>>, vector<8x768xf32>,
    return
  }
  func.func @transform_0(%arg0: i32, %arg1: memref<1xi32, #tpu.memory_space<smem>>) -> (i32, i32) {
    %c0_i32 = arith.constant 0 : i32
    %c0_i32_0 = arith.constant 0 : i32
    return %arg0, %c0_i32 : i32, i32
  }
  func.func @transform_1(%arg0: i32, %arg1: memref<1xi32, #tpu.memory_space<smem>>) -> (i32, i32) {
    %c0_i32 = arith.constant 0 : i32
    %c0_i32_0 = arith.constant 0 : i32
    return %arg0, %c0_i32 : i32, i32
  }
  func.func @transform_2(%arg0: i32, %arg1: memref<1xi32, #tpu.memory_space<smem>>) -> (i32, i32) {
    %c0_i32 = arith.constant 0 : i32
    %c0_i32_0 = arith.constant 0 : i32
    return %arg0, %c0_i32 : i32, i32
  }
}

</mosaic_0001>

<llo_original>
// kernel: tpu_custom_call.1
$region0: #{tpu_custom_call.1}
  #allocation0 [shape = 'u32[]', space=smem, size = 0x4, offset = 0x4, fixed_abs, tag = 'smem constant byte address 0x4 - core index']
  #allocation1 [shape = 'u32[144,128]{1,0:T(1,128)}', space=vmem, size = 0x12000, scoped, tag = 'internal scratch']
  #allocation2 [shape = 's32[1]{0}', space=sflag, size = 0x4, scoped, tag = 'scoped memory for tpu_custom_call.1']
  #allocation3 [shape = 's32[1]{0:T(128)S(6)}', space=smem, size = 0x200, scoped, tag = 'prefetched SMEM operand 0']
  %s0 = inlined_call_operand.<no memory space> [shape: s32[1], index: 0, kind: input, shape index: {}]
  %s1 = inlined_call_operand.hbm [shape: f32[24,768], index: 1, kind: input, shape index: {}]
  %s2 = inlined_call_operand.hbm [shape: f32[24,768], index: 2, kind: input, shape index: {}]
  %s3 = inlined_call_operand.hbm [shape: f32[24,768], index: 3, kind: output, shape index: {}]
  %s4 = sld [smem:[#allocation0]]
  $region49: #{tpu_custom_call.1} parent=0
    _
  %s6 = ssub.s32 1, %s4
  %s7 = scalar_select 0, %s6, %s4
  %8 = sst [smem:[#allocation3]] %s0
  $region1: #{tpu_custom_call.1} parent=0
    #allocation4 [shape = 'u8[49152]{0}', space=vmem, size = 0xc000, scoped, tag = 'input window, operand 1']
    #allocation5 [shape = 's32[2]{0}', space=sflag, size = 0x8, scoped, tag = 'scoped memory for tpu_custom_call.1']
    #allocation6 [shape = 's32[2]{0}', space=sflag, size = 0x8, scoped, tag = 'scoped memory for tpu_custom_call.1']
    #allocation7 [shape = 'u8[49152]{0}', space=vmem, size = 0xc000, scoped, tag = 'input window, operand 2']
    #allocation8 [shape = 's32[2]{0}', space=sflag, size = 0x8, scoped, tag = 'scoped memory for tpu_custom_call.1']
    #allocation9 [shape = 'u8[49152]{0}', space=vmem, size = 0xc000, scoped, tag = 'output window, operand 0']
    %9 = vsyncpa [#allocation5], 0
    %s10 = scalar_lea.sflag [#allocation5], 1
    %11 = vsyncpa %s10, 0
    %12 = vsyncpa [#allocation8], 0
    %s13 = scalar_lea.sflag [#allocation8], 1
    %14 = vsyncpa %s13, 0
    %15 = vsyncpa [#allocation6], 0
    %s16 = scalar_lea.sflag [#allocation6], 1
    %17 = vsyncpa %s16, 0
    loop: start=0, step=1, limit=5
    $region2: #{tpu_custom_call.1} parent=1 // loop_pre_header
      _
    $region3: #{tpu_custom_call.1} parent=1 // loop_header
      %s19 = sphi 0, %s23
      %p20 = scmp.ge.s32.totalorder %s19, 5
      %s29 = sphi 0, %s31
      %s32 = sphi 0, %s29
      %s33 = sphi 0, %s32
      %s49 = sphi 0, %s33
      %s55 = sphi 0, %s57
      %s58 = sphi 0, %s55
      %s59 = sphi 0, %s58
      %s75 = sphi 0, %s59
      %s81 = sphi 0, %s83
      %s84 = sphi 0, %s81
      %s85 = sphi 0, %s84
      %s101 = sphi 0, %s85
    $region4: #{tpu_custom_call.1} parent=1 // loop_header_branch
      %22 = sbr.rel (%p20) target = $region8
    $region5: #{tpu_custom_call.1} parent=1 // loop_body
      %s24 = ssub.s32 %s19, 1
      %s25 = ssub.s32 %s19, 2
      %s26 = sadd.s32 %s19, 1
      %s27 = ssub.s32 %s19, %s26
      %p28 = scmp.eq.s32.totalorder %s27, 0
      %s30 = sadd.s32 %s29, 1
      %s31 = scalar_select %p28, %s29, %s30
      %p34 = pneg %p28
      %p35 = scmp.eq.s32.totalorder %s19, 2
      %p36 = por %p34, %p35
      %p37 = scmp.ne.s32.totalorder %s29, %s32
      %p38 = scmp.eq.s32.totalorder %s19, 0
      %p39 = por %p37, %p38
      %p40 = scmp.ne.s32.totalorder %s29, %s32
      %p41 = scmp.eq.s32.totalorder %s24, 2
      %p42 = por %p40, %p41
      %p43 = scmp.ne.s32.totalorder %s32, %s33
      %p44 = scmp.eq.s32.totalorder %s24, 0
      %p45 = por %p43, %p44
      %p46 = scmp.ne.s32.totalorder %s32, %s33
      %p47 = scmp.eq.s32.totalorder %s25, 2
      %p48 = por %p46, %p47
      %p50 = scmp.ne.s32.totalorder %s33, %s49
      %p51 = scmp.eq.s32.totalorder %s25, 0
      %p52 = por %p50, %p51
      %s53 = ssub.s32 %s19, %s26
      %p54 = scmp.eq.s32.totalorder %s53, 0
      %s56 = sadd.s32 %s55, 1
      %s57 = scalar_select %p54, %s55, %s56
      %p60 = pneg %p54
      %p61 = scmp.eq.s32.totalorder %s19, 2
      %p62 = por %p60, %p61
      %p63 = scmp.ne.s32.totalorder %s55, %s58
      %p64 = scmp.eq.s32.totalorder %s19, 0
      %p65 = por %p63, %p64
      %p66 = scmp.ne.s32.totalorder %s55, %s58
      %p67 = scmp.eq.s32.totalorder %s24, 2
      %p68 = por %p66, %p67
      %p69 = scmp.ne.s32.totalorder %s58, %s59
      %p70 = scmp.eq.s32.totalorder %s24, 0
      %p71 = por %p69, %p70
      %p72 = scmp.ne.s32.totalorder %s58, %s59
      %p73 = scmp.eq.s32.totalorder %s25, 2
      %p74 = por %p72, %p73
      %p76 = scmp.ne.s32.totalorder %s59, %s75
      %p77 = scmp.eq.s32.totalorder %s25, 0
      %p78 = por %p76, %p77
      %s79 = ssub.s32 %s19, %s26
      %p80 = scmp.eq.s32.totalorder %s79, 0
      %s82 = sadd.s32 %s81, 1
      %s83 = scalar_select %p80, %s81, %s82
      %p86 = pneg %p80
      %p87 = scmp.eq.s32.totalorder %s19, 2
      %p88 = por %p86, %p87
      %p89 = scmp.ne.s32.totalorder %s81, %s84
      %p90 = scmp.eq.s32.totalorder %s19, 0
      %p91 = por %p89, %p90
      %p92 = scmp.ne.s32.totalorder %s81, %s84
      %p93 = scmp.eq.s32.totalorder %s24, 2
      %p94 = por %p92, %p93
      %p95 = scmp.ne.s32.totalorder %s84, %s85
      %p96 = scmp.eq.s32.totalorder %s24, 0
      %p97 = por %p95, %p96
      %p98 = scmp.ne.s32.totalorder %s84, %s85
      %p99 = scmp.eq.s32.totalorder %s25, 2
      %p100 = por %p98, %p99
      %p102 = scmp.ne.s32.totalorder %s85, %s101
      %p103 = scmp.eq.s32.totalorder %s25, 0
      %p104 = por %p102, %p103
      %p105 = scmp.le.s32.totalorder 1, %s19
      %p106 = scmp.lt.s32.totalorder %s19, 4
      %p107 = pnand %p105, %p106
      %p108 = pneg %p107
      // Predicated region
      $region9: #{tpu_custom_call.1} parent=5 // pred_check
        _
      $region10: #{tpu_custom_call.1} parent=5 // pred_check_branch
        %110 = sbr.rel (%p107) target = $region12
      $region11: #{tpu_custom_call.1} parent=5 // pred_region
        %s111 = ssub.s32 %s19, 1
      $region12: #{tpu_custom_call.1} parent=5 // pred_fallthru
        _
      %p112 = scmp.lt.s32.totalorder %s19, 3
      // Predicated region
      $region13: #{tpu_custom_call.1} parent=5 // pred_check
        %p113 = pneg %p112
      $region14: #{tpu_custom_call.1} parent=5 // pred_check_branch
        %115 = sbr.rel (%p113) target = $region16
      $region15: #{tpu_custom_call.1} parent=5 // pred_region
        // Predicated region
        $region17: #{tpu_custom_call.1} parent=15 // pred_check
          %p116 = pneg %p39
        $region18: #{tpu_custom_call.1} parent=15 // pred_check_branch
          %118 = sbr.rel (%p116) target = $region20
        $region19: #{tpu_custom_call.1} parent=15 // pred_region
          %s119 = sand.u32 %s29, 1
          %s120 = scalar_lea.sflag [#allocation5], %s119
          %s121 = sand.u32 %s29, 1
          %s122 = smul.addr %s121, 48
          %s123 = scalar_lea.vmem [#allocation4], %s122
          %s125 = ssub.s32 768, 768
          %126 = vsyncadd %s120, %s125
          %s127 = smul.addr %s19, 6
          %s128 = smul.addr %s127, 128
          %s129 = scalar_lea.hbm %s1, %s128
          %s131 = sshll.u32 %s123, 4
          %s132 = int_to_ptr.vmem [resolvable:$true] %s131
          %134 = dma.hbm_to_vmem [thread:$0]  %s129, 768, %s132, %s120
        $region20: #{tpu_custom_call.1} parent=15 // pred_fallthru
          _
        // Predicated region
        $region21: #{tpu_custom_call.1} parent=15 // pred_check
          %p135 = pneg %p65
        $region22: #{tpu_custom_call.1} parent=15 // pred_check_branch
          %137 = sbr.rel (%p135) target = $region24
        $region23: #{tpu_custom_call.1} parent=15 // pred_region
          %s138 = sand.u32 %s55, 1
          %s139 = scalar_lea.sflag [#allocation8], %s138
          %s140 = sand.u32 %s55, 1
          %s141 = smul.addr %s140, 48
          %s142 = scalar_lea.vmem [#allocation7], %s141
          %s144 = ssub.s32 768, 768
          %145 = vsyncadd %s139, %s144
          %s146 = smul.addr %s19, 6
          %s147 = smul.addr %s146, 128
          %s148 = scalar_lea.hbm %s2, %s147
          %s150 = sshll.u32 %s142, 4
          %s151 = int_to_ptr.vmem [resolvable:$true] %s150
          %153 = dma.hbm_to_vmem [thread:$0]  %s148, 768, %s151, %s139
        $region24: #{tpu_custom_call.1} parent=15 // pred_fallthru
          _
      $region16: #{tpu_custom_call.1} parent=5 // pred_fallthru
        _
      %p154 = scmp.le.s32.totalorder 1, %s19
      %p155 = scmp.lt.s32.totalorder %s19, 4
      %p156 = pnand %p154, %p155
      %p157 = pneg %p156
      // Predicated region
      $region25: #{tpu_custom_call.1} parent=5 // pred_check
        _
      $region26: #{tpu_custom_call.1} parent=5 // pred_check_branch
        %159 = sbr.rel (%p156) target = $region28
      $region27: #{tpu_custom_call.1} parent=5 // pred_region
        %s160 = ssub.s32 %s19, 1
        %s161 = sand.u32 %s32, 1
        %s162 = scalar_lea.sflag [#allocation5], %s161
        %s163 = sand.u32 %s32, 1
        %s164 = smul.addr %s163, 48
        %s165 = scalar_lea.vmem [#allocation4], %s164
        // Predicated region
        $region29: #{tpu_custom_call.1} parent=27 // pred_check
          %p166 = pneg %p45
        $region30: #{tpu_custom_call.1} parent=27 // pred_check_branch
          %168 = sbr.rel (%p166) target = $region32
        $region31: #{tpu_custom_call.1} parent=27 // pred_region
          %169 = dma.done %s162, 768
        $region32: #{tpu_custom_call.1} parent=27 // pred_fallthru
          _
        %s170 = sand.u32 %s58, 1
        %s171 = scalar_lea.sflag [#allocation8], %s170
        %s172 = sand.u32 %s58, 1
        %s173 = smul.addr %s172, 48
        %s174 = scalar_lea.vmem [#allocation7], %s173
        // Predicated region
        $region33: #{tpu_custom_call.1} parent=27 // pred_check
          %p175 = pneg %p71
        $region34: #{tpu_custom_call.1} parent=27 // pred_check_branch
          %177 = sbr.rel (%p175) target = $region36
        $region35: #{tpu_custom_call.1} parent=27 // pred_region
          %178 = dma.done %s171, 768
        $region36: #{tpu_custom_call.1} parent=27 // pred_fallthru
          _
        %s179 = sand.u32 %s32, 1
        %s180 = scalar_lea.sflag [#allocation5], %s179
        %s181 = sand.u32 %s32, 1
        %s182 = smul.addr %s181, 48
        %s183 = scalar_lea.vmem [#allocation4], %s182
        %p184 = pneg %p45
        %p185 = pneg %p42
        %s186 = sand.u32 %s58, 1
        %s187 = scalar_lea.sflag [#allocation8], %s186
        %s188 = sand.u32 %s58, 1
        %s189 = smul.addr %s188, 48
        %s190 = scalar_lea.vmem [#allocation7], %s189
        %p191 = pneg %p71
        %p192 = pneg %p68
        %p193 = pneg %p97
        %p194 = pneg %p94
        %s195 = sand.u32 %s84, 1
        %s196 = scalar_lea.sflag [#allocation6], %s195
        %s197 = sand.u32 %s84, 1
        %s198 = smul.addr %s197, 48
        %s199 = scalar_lea.vmem [#allocation9], %s198
        %v200 = vld [vmem:[%s165] sm:$0xff]
        %v201 = vld [vmem:[%s165 + $0x8] sm:$0xff]
        %v202 = vld [vmem:[%s165 + $0x10] sm:$0xff]
        %v203 = vld [vmem:[%s165 + $0x18] sm:$0xff]
        %v204 = vld [vmem:[%s165 + $0x20] sm:$0xff]
        %v205 = vld [vmem:[%s165 + $0x28] sm:$0xff]
        %v206 = vld [vmem:[%s174] sm:$0xff]
        %v207 = vld [vmem:[%s174 + $0x8] sm:$0xff]
        %v208 = vld [vmem:[%s174 + $0x10] sm:$0xff]
        %v209 = vld [vmem:[%s174 + $0x18] sm:$0xff]
        %v210 = vld [vmem:[%s174 + $0x20] sm:$0xff]
        %v211 = vld [vmem:[%s174 + $0x28] sm:$0xff]
        %v212 = vmul.f32 %v200, %v206
        %v213 = vmul.f32 %v201, %v207
        %v214 = vmul.f32 %v202, %v208
        %v215 = vmul.f32 %v203, %v209
        %v216 = vmul.f32 %v204, %v210
        %v217 = vmul.f32 %v205, %v211
        %v218 = vlaneseq
        %v219 = vshrl.u32 %v218, 7
        %v220 = vlaneseq
        %v221 = vand.u32 %v220, 127
        %v222 = vadd.s32 %v221, 128
        %v223 = vadd.s32 %v221, 256
        %v224 = vadd.s32 %v221, 384
        %v225 = vadd.s32 %v221, 512
        %v226 = vadd.s32 %v221, 640
        %s227 = smul.u32 %s24, 8
        %v228 = vstv %s227
        %v229 = vadd.s32 %v219, %v228
        %v230 = vmul.u32 %v229, 768
        %v231 = vadd.s32 %v230, %v221
        %v232 = vadd.s32 %v230, %v222
        %v233 = vadd.s32 %v230, %v223
        %v234 = vadd.s32 %v230, %v224
        %v235 = vadd.s32 %v230, %v225
        %v236 = vadd.s32 %v230, %v226
        %s237 = sld [smem:[#allocation3]]
        %s238 = smul.u32 %s237, 2654435769
        %v239 = vstv %s238
        %v240 = vxor.u32 %v231, %v239
        %v241 = vxor.u32 %v232, %v239
        %v242 = vxor.u32 %v233, %v239
        %v243 = vxor.u32 %v234, %v239
        %v244 = vxor.u32 %v235, %v239
        %v245 = vxor.u32 %v236, %v239
        %v246 = vshrl.u32 %v240, 16
        %v247 = vshrl.u32 %v241, 16
        %v248 = vshrl.u32 %v242, 16
        %v249 = vshrl.u32 %v243, 16
        %v250 = vshrl.u32 %v244, 16
        %v251 = vshrl.u32 %v245, 16
        %v252 = vxor.u32 %v240, %v246
        %v253 = vxor.u32 %v241, %v247
        %v254 = vxor.u32 %v242, %v248
        %v255 = vxor.u32 %v243, %v249
        %v256 = vxor.u32 %v244, %v250
        %v257 = vxor.u32 %v245, %v251
        %v258 = vmul.u32 %v252, 2146121005
        %v259 = vmul.u32 %v253, 2146121005
        %v260 = vmul.u32 %v254, 2146121005
        %v261 = vmul.u32 %v255, 2146121005
        %v262 = vmul.u32 %v256, 2146121005
        %v263 = vmul.u32 %v257, 2146121005
        %v264 = vshrl.u32 %v258, 15
        %v265 = vshrl.u32 %v259, 15
        %v266 = vshrl.u32 %v260, 15
        %v267 = vshrl.u32 %v261, 15
        %v268 = vshrl.u32 %v262, 15
        %v269 = vshrl.u32 %v263, 15
        %v270 = vxor.u32 %v258, %v264
        %v271 = vxor.u32 %v259, %v265
        %v272 = vxor.u32 %v260, %v266
        %v273 = vxor.u32 %v261, %v267
        %v274 = vxor.u32 %v262, %v268
        %v275 = vxor.u32 %v263, %v269
        %v276 = vmul.u32 %v270, 2221713035
        %v277 = vmul.u32 %v271, 2221713035
        %v278 = vmul.u32 %v272, 2221713035
        %v279 = vmul.u32 %v273, 2221713035
        %v280 = vmul.u32 %v274, 2221713035
        %v281 = vmul.u32 %v275, 2221713035
        %v282 = vshrl.u32 %v276, 16
        %v283 = vshrl.u32 %v277, 16
        %v284 = vshrl.u32 %v278, 16
        %v285 = vshrl.u32 %v279, 16
        %v286 = vshrl.u32 %v280, 16
        %v287 = vshrl.u32 %v281, 16
        %v288 = vxor.u32 %v276, %v282
        %v289 = vxor.u32 %v277, %v283
        %v290 = vxor.u32 %v278, %v284
        %v291 = vxor.u32 %v279, %v285
        %v292 = vxor.u32 %v280, %v286
        %v293 = vxor.u32 %v281, %v287
        %vm294 = vcmp.ge.u32.totalorder %v288, 429496730
        %vm295 = vcmp.ge.u32.totalorder %v289, 429496730
        %vm296 = vcmp.ge.u32.totalorder %v290, 429496730
        %vm297 = vcmp.ge.u32.totalorder %v291, 429496730
        %vm298 = vcmp.ge.u32.totalorder %v292, 429496730
        %vm299 = vcmp.ge.u32.totalorder %v293, 429496730
        %v300 = vmul.f32 %v212, 1.1111112
        %v301 = vmul.f32 %v213, 1.1111112
        %v302 = vmul.f32 %v214, 1.1111112
        %v303 = vmul.f32 %v215, 1.1111112
        %v304 = vmul.f32 %v216, 1.1111112
        %v305 = vmul.f32 %v217, 1.1111112
        %v306 = vsel %vm294, %v300, 0.0
        %v307 = vsel %vm295, %v301, 0.0
        %v308 = vsel %vm296, %v302, 0.0
        %v309 = vsel %vm297, %v303, 0.0
        %v310 = vsel %vm298, %v304, 0.0
        %v311 = vsel %vm299, %v305, 0.0
        %312 = vst [vmem:[%s199] sm:$0xff] %v306
        %313 = vst [vmem:[%s199 + $0x8] sm:$0xff] %v307
        %314 = vst [vmem:[%s199 + $0x10] sm:$0xff] %v308
        %315 = vst [vmem:[%s199 + $0x18] sm:$0xff] %v309
        %316 = vst [vmem:[%s199 + $0x20] sm:$0xff] %v310
        %317 = vst [vmem:[%s199 + $0x28] sm:$0xff] %v311
        %s318 = sand.u32 %s84, 1
        %s319 = scalar_lea.sflag [#allocation6], %s318
        %s320 = sand.u32 %s84, 1
        %s321 = smul.addr %s320, 48
        %s322 = scalar_lea.vmem [#allocation9], %s321
        // Predicated region
        $region37: #{tpu_custom_call.1} parent=27 // pred_check
          %p323 = pneg %p94
        $region38: #{tpu_custom_call.1} parent=27 // pred_check_branch
          %325 = sbr.rel (%p323) target = $region40
        $region39: #{tpu_custom_call.1} parent=27 // pred_region
          %s327 = ssub.s32 768, 768
          %328 = vsyncadd %s319, %s327
          %s329 = smul.addr %s24, 6
          %s330 = smul.addr %s329, 128
          %s331 = scalar_lea.hbm %s3, %s330
          %s333 = sshll.u32 %s322, 4
          %s334 = int_to_ptr.vmem [resolvable:$true] %s333
          %336 = dma.vmem_to_hbm [thread:$0]  %s334, 768, %s331, %s319
        $region40: #{tpu_custom_call.1} parent=27 // pred_fallthru
          _
      $region28: #{tpu_custom_call.1} parent=5 // pred_fallthru
        _
      %p337 = scmp.le.s32.totalorder 2, %s19
      // Predicated region
      $region41: #{tpu_custom_call.1} parent=5 // pred_check
        %p338 = pneg %p337
      $region42: #{tpu_custom_call.1} parent=5 // pred_check_branch
        %340 = sbr.rel (%p338) target = $region44
      $region43: #{tpu_custom_call.1} parent=5 // pred_region
        %s341 = ssub.s32 %s19, 2
        // Predicated region
        $region45: #{tpu_custom_call.1} parent=43 // pred_check
          %p342 = pneg %p100
        $region46: #{tpu_custom_call.1} parent=43 // pred_check_branch
          %344 = sbr.rel (%p342) target = $region48
        $region47: #{tpu_custom_call.1} parent=43 // pred_region
          %s345 = sand.u32 %s85, 1
          %s346 = scalar_lea.sflag [#allocation6], %s345
          %s347 = sand.u32 %s85, 1
          %s348 = smul.addr %s347, 48
          %s349 = scalar_lea.vmem [#allocation9], %s348
          %350 = dma.done %s346, 768
        $region48: #{tpu_custom_call.1} parent=43 // pred_fallthru
          _
      $region44: #{tpu_custom_call.1} parent=5 // pred_fallthru
        _
    $region6: #{tpu_custom_call.1} parent=1 // loop_footer
      %s23 = sadd.s32 1, %s19
    $region7: #{tpu_custom_call.1} parent=1 // loop_footer_branch
      %18 = sbr.rel target = $region3
    $region8: #{tpu_custom_call.1} parent=1 // loop_exit
      _
    %351 = vsyncpa [#allocation5], 1
    %s352 = scalar_lea.sflag [#allocation5], 1
    %353 = vsyncpa %s352, 1
    %354 = vsyncpa [#allocation8], 1
    %s355 = scalar_lea.sflag [#allocation8], 1
    %356 = vsyncpa %s355, 1
    %357 = vsyncpa [#allocation6], 1
    %s358 = scalar_lea.sflag [#allocation6], 1
    %359 = vsyncpa %s358, 1

</llo_original>
